<compile_context>
chip_gen: v7x
topology: tpu7x:2x2x1
jax: 0.10.0
libtpu: 0.0.40
codegen_flags: <defaults>
</compile_context>

<pallas_src>
import math
import functools

import jax
import jax.numpy as jnp
from jax import lax
from jax.experimental import pallas as pl
from jax.experimental.pallas import tpu as pltpu


def _pick_tile(dim, candidates):
    """Largest candidate that divides `dim`; fall back to the full dim."""
    for c in candidates:
        if c <= dim and dim % c == 0:
            return c
    return dim


# ---------------------------------------------------------------------------
# Tiled linear kernel:  y = x @ W_t + b   (used for QKV and output proj).
# ---------------------------------------------------------------------------
def _linear_kernel(x_ref, w_ref, b_ref, o_ref):
    acc = jnp.dot(x_ref[...], w_ref[...], preferred_element_type=jnp.float32)
    o_ref[...] = (acc + b_ref[...]).astype(o_ref.dtype)


def linear(x, w_t, b, *, out_dtype, vmem_limit_bytes=None):
    """x: (M, K), w_t: (K, N) pre-transposed, b: (N,). Returns (M, N)."""
    M, K = x.shape
    K2, N = w_t.shape
    assert K == K2
    tm = _pick_tile(M, (256, 128, 64, 32, 16, 8))
    tn = _pick_tile(N, (512, 384, 256, 128))
    b2 = b.reshape(1, N).astype(jnp.float32)

    grid_spec = pltpu.PrefetchScalarGridSpec(
        num_scalar_prefetch=0,
        grid=(M // tm, N // tn),
        in_specs=[
            pl.BlockSpec((tm, K), lambda i, j: (i, 0)),   # activations (row tile)
            pl.BlockSpec((K, tn), lambda i, j: (0, j)),   # weights (col tile)
            pl.BlockSpec((1, tn), lambda i, j: (0, j)),   # bias
        ],
        out_specs=pl.BlockSpec((tm, tn), lambda i, j: (i, j)),
    )
    return pl.pallas_call(
        _linear_kernel,
        out_shape=jax.ShapeDtypeStruct((M, N), out_dtype),
        grid_spec=grid_spec,
        compiler_params=pltpu.CompilerParams(
            dimension_semantics=("parallel", "parallel"),
            vmem_limit_bytes=vmem_limit_bytes,
        ),
    )(x, w_t, b2)


# ---------------------------------------------------------------------------
# Flash-style attention kernel: grid = (B*H, n_q_tiles, n_kv_tiles).
# ---------------------------------------------------------------------------
def _flash_kernel(q_ref, k_ref, v_ref, o_ref, m_ref, l_ref, acc_ref, *, scale):
    ki = pl.program_id(2)

    @pl.when(ki == 0)
    def _():
        m_ref[...] = jnp.full_like(m_ref, -jnp.inf)
        l_ref[...] = jnp.zeros_like(l_ref)
        acc_ref[...] = jnp.zeros_like(acc_ref)

    q = q_ref[0] * scale                                   # (tq, hd)
    k = k_ref[0]                                           # (tk, hd)
    v = v_ref[0]                                           # (tk, hd)

    # scores = q @ k^T without materializing the transpose.
    s = lax.dot_general(q, k, (((1,), (1,)), ((), ())),
                        preferred_element_type=jnp.float32)   # (tq, tk) f32

    # online (numerically stable) softmax, all stats in f32
    m_prev = m_ref[...]
    m_new = jnp.maximum(m_prev, jnp.max(s, axis=-1, keepdims=True))
    alpha = jnp.exp(m_prev - m_new)
    p = jnp.exp(s - m_new)
    l_ref[...] = alpha * l_ref[...] + jnp.sum(p, axis=-1, keepdims=True)
    acc_ref[...] = alpha * acc_ref[...] + jnp.dot(
        p.astype(v.dtype), v, preferred_element_type=jnp.float32)
    m_ref[...] = m_new

    @pl.when(ki == pl.num_programs(2) - 1)
    def _():
        inv = pl.reciprocal(l_ref[...], approx=False)      # exact normalization
        o_ref[0] = (acc_ref[...] * inv).astype(o_ref.dtype)


def flash_attention(q, k, v, *, scale, q_tile=128, kv_tile=128,
                    vmem_limit_bytes=None):
    """q, k, v: (B*H, T, hd) head-leading layout. Returns (B*H, T, hd)."""
    BH, T, hd = q.shape
    tq = _pick_tile(T, tuple(c for c in (256, 128, 64, 32, 16, 8) if c <= q_tile))
    tk = _pick_tile(T, tuple(c for c in (256, 128, 64, 32, 16, 8) if c <= kv_tile))

    kernel = functools.partial(_flash_kernel, scale=scale)
    grid_spec = pltpu.PrefetchScalarGridSpec(
        num_scalar_prefetch=0,
        grid=(BH, T // tq, T // tk),
        in_specs=[
            pl.BlockSpec((1, tq, hd), lambda b, qi, ki: (b, qi, 0)),  # q tile
            pl.BlockSpec((1, tk, hd), lambda b, qi, ki: (b, ki, 0)),  # k tile
            pl.BlockSpec((1, tk, hd), lambda b, qi, ki: (b, ki, 0)),  # v tile
        ],
        out_specs=pl.BlockSpec((1, tq, hd), lambda b, qi, ki: (b, qi, 0)),
        scratch_shapes=[
            pltpu.VMEM((tq, 1), jnp.float32),   # running max m
            pltpu.VMEM((tq, 1), jnp.float32),   # running sum l
            pltpu.VMEM((tq, hd), jnp.float32),  # f32 accumulator
        ],
    )
    return pl.pallas_call(
        kernel,
        out_shape=jax.ShapeDtypeStruct((BH, T, hd), q.dtype),
        grid_spec=grid_spec,
        compiler_params=pltpu.CompilerParams(
            # KV axis is the accumulator -> must stay sequential ("arbitrary");
            # batch*head and q-tile axes are independent -> "parallel"
            # (uses both TensorCores on v7x even when B == 1).
            dimension_semantics=("parallel", "parallel", "arbitrary"),
            vmem_limit_bytes=vmem_limit_bytes,
        ),
    )(q, k, v)


# ---------------------------------------------------------------------------
# Full forward pass.
# ---------------------------------------------------------------------------
def mhsa_forward(x, wqkv, bqkv, wout, bout, *, num_heads, q_tile=128,
                 kv_tile=128, compute_dtype=None, vmem_limit_bytes=None):
    B, T, C = x.shape
    assert C % num_heads == 0
    H = num_heads
    hd = C // H
    scale = 1.0 / math.sqrt(hd)
    cd = compute_dtype if compute_dtype is not None else x.dtype

    # -- stage 1: QKV projection (full C-wide contraction, full MXU width) --
    wqkv_t = jnp.asarray(wqkv.T, dtype=cd)                # (C, 3C)
    x2 = x.reshape(B * T, C).astype(cd)
    qkv = linear(x2, wqkv_t, bqkv, out_dtype=cd,
                 vmem_limit_bytes=vmem_limit_bytes)       # (B*T, 3C)

    # head-leading layout (HBM layout plumbing done by XLA, not in-kernel)
    qkv = qkv.reshape(B, T, 3, H, hd).transpose(2, 0, 3, 1, 4)  # (3,B,H,T,hd)
    q = qkv[0].reshape(B * H, T, hd)
    k = qkv[1].reshape(B * H, T, hd)
    v = qkv[2].reshape(B * H, T, hd)

    # -- stage 2: flash attention; VMEM footprint independent of T ---------
    attn = flash_attention(q, k, v, scale=scale, q_tile=q_tile,
                           kv_tile=kv_tile,
                           vmem_limit_bytes=vmem_limit_bytes)  # (B*H, T, hd)

    # -- stage 3: output projection: ONE (B*T, C) @ (C, C) matmul ----------
    attn = attn.reshape(B, H, T, hd).transpose(0, 2, 1, 3).reshape(B * T, C)
    wout_t = jnp.asarray(wout.T, dtype=cd)                # (C, C)
    out = linear(attn.astype(cd), wout_t, bout, out_dtype=x.dtype,
                 vmem_limit_bytes=vmem_limit_bytes)       # (B*T, C)
    return out.reshape(B, T, C)


def mhsa_reference(x, wqkv, bqkv, wout, bout, *, num_heads):
    """Pure-JAX reference mirroring the PyTorch forward exactly."""
    B, T, C = x.shape
    hd = C // num_heads
    qkv = x @ wqkv.T + bqkv                                   # (B, T, 3C)
    qkv = qkv.reshape(B, T, 3, num_heads, hd).transpose(2, 0, 3, 1, 4)
    q, k, v = qkv[0], qkv[1], qkv[2]                          # (B, H, T, hd)
    scores = (q @ jnp.swapaxes(k, -2, -1)) / math.sqrt(hd)
    attn = jax.nn.softmax(scores, axis=-1)
    out = jnp.swapaxes(attn @ v, 1, 2).reshape(B, T, C)
    return out @ wout.T + bout


if __name__ == "__main__":
    B, T, C, H = 2, 8, 32, 4

    key = jax.random.PRNGKey(0)
    kx, kw1, kb1, kw2, kb2 = jax.random.split(key, 5)

    # torch.nn.Linear default init: U(-1/sqrt(fan_in), 1/sqrt(fan_in))
    bound = 1.0 / math.sqrt(C)
    x = jax.random.normal(kx, (B, T, C), dtype=jnp.float32)
    wqkv = jax.random.uniform(kw1, (3 * C, C), jnp.float32, -bound, bound)
    bqkv = jax.random.uniform(kb1, (3 * C,), jnp.float32, -bound, bound)
    wout = jax.random.uniform(kw2, (C, C), jnp.float32, -bound, bound)
    bout = jax.random.uniform(kb2, (C,), jnp.float32, -bound, bound)

    with jax.default_matmul_precision("highest"):
        ref = mhsa_reference(x, wqkv, bqkv, wout, bout, num_heads=H)
    ref = jax.block_until_ready(ref)

    # f32 compute path
    out = mhsa_forward(x, wqkv, bqkv, wout, bout, num_heads=H)
    out = jax.block_until_ready(out)
    assert out.shape == (B, T, C)
    assert jnp.allclose(out, ref, atol=1e-3, rtol=1e-3), "f32 mismatch vs reference"

    # bf16 MXU path (production setting on v5e/v6e/v7x): f32 accumulation,
    # looser tolerance for bf16 rounding.
    out_bf16 = mhsa_forward(x, wqkv, bqkv, wout, bout, num_heads=H,
                            compute_dtype=jnp.bfloat16)
    out_bf16 = jax.block_until_ready(out_bf16)
    assert jnp.allclose(out_bf16, ref, atol=5e-2, rtol=5e-2), "bf16 mismatch vs reference"

    print("KERNEL_OK")
</pallas_src>

<mosaic_0001>
module attributes {stable_mosaic.version = 11 : i64} {
  func.func @_linear_kernel(%arg0: i32, %arg1: i32, %arg2: memref<16x32xf32, #tpu.memory_space<vmem>>, %arg3: memref<32x96xf32, #tpu.memory_space<vmem>>, %arg4: memref<1x96xf32, #tpu.memory_space<vmem>>, %arg5: memref<16x96xf32, #tpu.memory_space<vmem>>) attributes {dimension_semantics = [#tpu.dimension_semantics<parallel>, #tpu.dimension_semantics<parallel>], iteration_bounds = array<i64: 1, 1>, scalar_prefetch = 0 : i64, scratch_operands = 0 : i64, tpu.core_type = #tpu.core_type<tc>, window_params = [{transform_indices = @transform_0, window_bounds = array<i64: 16, 32>}, {transform_indices = @transform_1, window_bounds = array<i64: 32, 96>}, {transform_indices = @transform_2, window_bounds = array<i64: 1, 96>}, {transform_indices = @transform_3, window_bounds = array<i64: 16, 96>}]} {
    %c0 = arith.constant 0 : index
    %c0_0 = arith.constant 0 : index
    %0 = vector.load %arg2[%c0, %c0_0] : memref<16x32xf32, #tpu.memory_space<vmem>>, vector<16x32xf32>
    %c0_1 = arith.constant 0 : index
    %c0_2 = arith.constant 0 : index
    %1 = vector.load %arg3[%c0_1, %c0_2] : memref<32x96xf32, #tpu.memory_space<vmem>>, vector<32x96xf32>
    %cst = arith.constant dense<0.000000e+00> : vector<16x96xf32>
    %2 = tpu.matmul %0, %1, %cst {dimension_numbers = #tpu.dot_dimension_numbers<[1], [0], [0], [1], [0, 0, 1, 1], [], []>} : vector<16x32xf32>, vector<32x96xf32>, vector<16x96xf32> -> vector<16x96xf32>
    %c0_3 = arith.constant 0 : index
    %c0_4 = arith.constant 0 : index
    %3 = vector.load %arg4[%c0_3, %c0_4] : memref<1x96xf32, #tpu.memory_space<vmem>>, vector<1x96xf32>
    %4 = vector.broadcast %3 : vector<1x96xf32> to vector<16x96xf32>
    %5 = arith.addf %2, %4 : vector<16x96xf32>
    %c0_5 = arith.constant 0 : index
    %c0_6 = arith.constant 0 : index
    %6 = vector.load %arg5[%c0_5, %c0_6] : memref<16x96xf32, #tpu.memory_space<vmem>>, vector<16x96xf32>
    tpu.vector_store %arg5[%c0_5, %c0_6], %5 {strides = array<i32>} : memref<16x96xf32, #tpu.memory_space<vmem>>, vector<16x96xf32>,
    return
  }
  func.func @transform_0(%arg0: i32, %arg1: i32) -> (i32, i32) {
    %c0_i32 = arith.constant 0 : i32
    %c0_i32_0 = arith.constant 0 : i32
    return %arg0, %c0_i32 : i32, i32
  }
  func.func @transform_1(%arg0: i32, %arg1: i32) -> (i32, i32) {
    %c0_i32 = arith.constant 0 : i32
    %c0_i32_0 = arith.constant 0 : i32
    return %c0_i32, %arg1 : i32, i32
  }
  func.func @transform_2(%arg0: i32, %arg1: i32) -> (i32, i32) {
    %c0_i32 = arith.constant 0 : i32
    %c0_i32_0 = arith.constant 0 : i32
    return %c0_i32, %arg1 : i32, i32
  }
  func.func @transform_3(%arg0: i32, %arg1: i32) -> (i32, i32) {
    %c0_i32 = arith.constant 0 : i32
    return %arg0, %arg1 : i32, i32
  }
}

</mosaic_0001>

<llo_original>
// kernel: tpu_custom_call.1
$region0: #{tpu_custom_call.1}
  #allocation0 [shape = 'u32[]', space=smem, size = 0x4, offset = 0x4, fixed_abs, tag = 'smem constant byte address 0x4 - core index']
  #allocation1 [shape = 'u32[144,128]{1,0:T(1,128)}', space=vmem, size = 0x12000, scoped, tag = 'internal scratch']
  %s0 = inlined_call_operand.hbm [shape: f32[16,32], index: 0, kind: input, shape index: {}]
  %s1 = inlined_call_operand.hbm [shape: f32[32,96], index: 1, kind: input, shape index: {}]
  %s2 = inlined_call_operand.vmem [shape: f32[1,96], index: 2, kind: input, shape index: {}]
  %s3 = inlined_call_operand.hbm [shape: f32[16,96], index: 3, kind: output, shape index: {}]
  %s4 = sld [smem:[#allocation0]]
  $region30: #{tpu_custom_call.1} parent=0
    _
  %s6 = ssub.s32 1, %s4
  %s7 = scalar_select 0, %s6, %s4
  $region1: #{tpu_custom_call.1} parent=0
    #allocation2 [shape = 'u8[8192]{0}', space=vmem, size = 0x2000, scoped, tag = 'input window, operand 0, single buffered']
    #allocation3 [shape = 's32[1]{0}', space=sflag, size = 0x4, scoped, tag = 'scoped memory for tpu_custom_call.1']
    #allocation4 [shape = 's32[1]{0}', space=sflag, size = 0x4, scoped, tag = 'scoped memory for tpu_custom_call.1']
    #allocation5 [shape = 'u8[16384]{0}', space=vmem, size = 0x4000, scoped, tag = 'input window, operand 1, single buffered']
    #allocation6 [shape = 's32[1]{0}', space=sflag, size = 0x4, scoped, tag = 'scoped memory for tpu_custom_call.1']
    #allocation7 [shape = 'u8[8192]{0}', space=vmem, size = 0x2000, scoped, tag = 'output window, operand 0, single buffered']
    %8 = vsyncpa [#allocation3], 0
    %9 = vsyncpa [#allocation6], 0
    %10 = vsyncpa [#allocation4], 0
    // Predicated region
    $region2: #{tpu_custom_call.1} parent=1 // pred_check
      _
    $region3: #{tpu_custom_call.1} parent=1 // pred_check_branch
      %12 = sbr.rel (0) target = $region5
    $region4: #{tpu_custom_call.1} parent=1 // pred_region
      %s14 = ssub.s32 256, 256
      %15 = vsyncadd [#allocation3], %s14
      %s16 = sshll.u32 [#allocation2], 4
      %s17 = int_to_ptr.vmem [resolvable:$true] %s16
      %22 = dma.hbm_to_vmem [thread:$0]  %s0, 256, %s17, [#allocation3], 128, 128, 8
    $region5: #{tpu_custom_call.1} parent=1 // pred_fallthru
      _
    // Predicated region
    $region6: #{tpu_custom_call.1} parent=1 // pred_check
      _
    $region7: #{tpu_custom_call.1} parent=1 // pred_check_branch
      %24 = sbr.rel (0) target = $region9
    $region8: #{tpu_custom_call.1} parent=1 // pred_region
      %s26 = ssub.s32 512, 512
      %27 = vsyncadd [#allocation6], %s26
      %s28 = sshll.u32 [#allocation5], 4
      %s29 = int_to_ptr.vmem [resolvable:$true] %s28
      %34 = dma.hbm_to_vmem [thread:$0]  %s1, 512, %s29, [#allocation6], 128, 128, 8
    $region9: #{tpu_custom_call.1} parent=1 // pred_fallthru
      _
    // Predicated region
    $region10: #{tpu_custom_call.1} parent=1 // pred_check
      _
    $region11: #{tpu_custom_call.1} parent=1 // pred_check_branch
      %36 = sbr.rel (0) target = $region13
    $region12: #{tpu_custom_call.1} parent=1 // pred_region
      _
    $region13: #{tpu_custom_call.1} parent=1 // pred_fallthru
      _
    // Predicated region
    $region14: #{tpu_custom_call.1} parent=1 // pred_check
      _
    $region15: #{tpu_custom_call.1} parent=1 // pred_check_branch
      %38 = sbr.rel (0) target = $region17
    $region16: #{tpu_custom_call.1} parent=1 // pred_region
      %39 = dma.done [#allocation3], 256
    $region17: #{tpu_custom_call.1} parent=1 // pred_fallthru
      _
    // Predicated region
    $region18: #{tpu_custom_call.1} parent=1 // pred_check
      _
    $region19: #{tpu_custom_call.1} parent=1 // pred_check_branch
      %41 = sbr.rel (0) target = $region21
    $region20: #{tpu_custom_call.1} parent=1 // pred_region
      %42 = dma.done [#allocation6], 512
    $region21: #{tpu_custom_call.1} parent=1 // pred_fallthru
      _
    %v43 = vld [vmem:[#allocation2] sm:$0xff]
    %v44 = vld [vmem:[#allocation2 + $0x8] sm:$0xff]
    %v45 = vld [vmem:[#allocation5] sm:$0xff]
    %v46 = vld [vmem:[#allocation5 + $0x8] sm:$0xff]
    %v47 = vld [vmem:[#allocation5 + $0x10] sm:$0xff]
    %v48 = vld [vmem:[#allocation5 + $0x18] sm:$0xff]
    %v49 = vld [vmem:[%s2] sm:$0x1]
    %v51 = vlaneseq
    %v52 = vshrl.u32 %v51, 7
    %v53 = vsub.s32 0, %v52
    %v54 = vrot.slane %v49, %v53
    %vm56 = vcmask 261120
    %v58 = vsel %vm56, %v43, 0
    %v61 = vsel %vm56, %v44, 0
    %63 = vmatprep.subr.mxu0 0.0
    %64 = vmatpush1.msra.mxu0 %v45
    %65 = vmatprep.subr.mxu0 0.0
    %66 = vmatpush1.msra.mxu0 %v46
    %67 = vmatprep.subr.mxu0 0.0
    %68 = vmatpush1.msra.mxu0 %v47
    %69 = vmatprep.subr.mxu0 0.0
    %70 = vmatpush1.msra.mxu0 %v48
    %71 = vmatprep.subr.mxu0 0.0
    %72 = vmatpush1.msra.mxu0 0.0
    %73 = vmatprep.subr.mxu0 0.0
    %74 = vmatpush1.msra.mxu0 0.0
    %75 = vmatprep.subr.mxu0 0.0
    %76 = vmatpush1.msra.mxu0 0.0
    %77 = vmatprep.subr.mxu0 0.0
    %78 = vmatpush1.msra.mxu0 0.0
    %79 = vmatprep.subr.mxu0 0.0
    %80 = vmatpush1.msra.mxu0 0.0
    %81 = vmatprep.subr.mxu0 0.0
    %82 = vmatpush1.msra.mxu0 0.0
    %83 = vmatprep.subr.mxu0 0.0
    %84 = vmatpush1.msra.mxu0 0.0
    %85 = vmatprep.subr.mxu0 0.0
    %86 = vmatpush1.msra.mxu0 0.0
    %87 = vmatprep.subr.mxu0 0.0
    %88 = vmatpush1.msra.mxu0 0.0
    %89 = vmatprep.subr.mxu0 0.0
    %90 = vmatpush1.msra.mxu0 0.0
    %91 = vmatprep.subr.mxu0 0.0
    %92 = vmatpush1.msra.mxu0 0.0
    %93 = vmatprep.subr.mxu0 0.0
    %94 = vmatpush1.msra.mxu0 0.0
    %95 = vmatprep.subr.mxu0 0.0
    %96 = vmatpush1.msra.mxu0 0.0
    %97 = vmatprep.subr.mxu0 0.0
    %98 = vmatpush1.msra.mxu0 0.0
    %99 = vmatprep.subr.mxu0 0.0
    %100 = vmatpush1.msra.mxu0 0.0
    %101 = vmatprep.subr.mxu0 0.0
    %102 = vmatpush1.msra.mxu0 0.0
    %103 = vmatprep.subr.mxu0 0.0
    %104 = vmatpush1.msra.mxu0 0.0
    %105 = vmatprep.subr.mxu0 0.0
    %106 = vmatpush1.msra.mxu0 0.0
    %107 = vmatprep.subr.mxu0 0.0
    %108 = vmatpush1.msra.mxu0 0.0
    %109 = vmatprep.subr.mxu0 0.0
    %110 = vmatpush1.msra.mxu0 0.0
    %111 = vmatprep.subr.mxu0 0.0
    %112 = vmatpush1.msra.mxu0 0.0
    %113 = vmatprep.subr.mxu0 0.0
    %114 = vmatpush1.msra.mxu0 0.0
    %115 = vmatprep.subr.mxu0 0.0
    %116 = vmatpush1.msra.mxu0 0.0
    %117 = vmatprep.subr.mxu0 0.0
    %118 = vmatpush1.msra.mxu0 0.0
    %119 = vmatprep.subr.mxu0 0.0
    %120 = vmatpush1.msra.mxu0 0.0
    %121 = vmatprep.subr.mxu0 0.0
    %122 = vmatpush1.msra.mxu0 0.0
    %123 = vmatprep.subr.mxu0 0.0
    %124 = vmatpush1.msra.mxu0 0.0
    %125 = vmatprep.subr.mxu0 0.0
    %126 = vmatpush1.msra.mxu0 0.0
    %127 = vmatprep.mubr.f32.mxu0 0.0
    %128 = vmatmul.mubr.f32.gmra.mrb[0].mxu0 %v58
    %v129 = vpop.f32.mrb[0].mxu0
    %v130 = vadd.f32 %v54, %v129
    %v131 = vpop.f32.mrb[0].mxu0
    %132 = vmatprep.mubr.f32.mxu0 0.0
    %133 = vmatmul.mubr.f32.gmra.mrb[0].mxu0 %v61
    %v134 = vpop.f32.mrb[0].mxu0
    %v135 = vadd.f32 %v54, %v134
    %v136 = vpop.f32.mrb[0].mxu0
    %137 = vdwg.mxu0
    %vm138 = vcmask 785408
    %139 = vst.msk [vmem:[#allocation7] sm:$0xff] %vm138, %v130
    %140 = vst.msk [vmem:[#allocation7 + $0x8] sm:$0xff] %vm138, %v135
    // Predicated region
    $region22: #{tpu_custom_call.1} parent=1 // pred_check
      _
    $region23: #{tpu_custom_call.1} parent=1 // pred_check_branch
      %142 = sbr.rel (0) target = $region25
    $region24: #{tpu_custom_call.1} parent=1 // pred_region
      %s144 = ssub.s32 256, 256
      %145 = vsyncadd [#allocation4], %s144
      %s146 = sshll.u32 [#allocation7], 4
      %s147 = int_to_ptr.vmem [resolvable:$true] %s146
      %152 = dma.vmem_to_hbm [thread:$0]  %s147, 256, %s3, [#allocation4], 128, 128, 8
    $region25: #{tpu_custom_call.1} parent=1 // pred_fallthru
      _
    // Predicated region
    $region26: #{tpu_custom_call.1} parent=1 // pred_check
      _
    $region27: #{tpu_custom_call.1} parent=1 // pred_check_branch
      %154 = sbr.rel (0) target = $region29
    $region28: #{tpu_custom_call.1} parent=1 // pred_region
      %155 = dma.done [#allocation4], 256
    $region29: #{tpu_custom_call.1} parent=1 // pred_fallthru
      _
    %156 = vsyncpa [#allocation3], 1
    %157 = vsyncpa [#allocation6], 1
    %158 = vsyncpa [#allocation4], 1

</llo_original>
